<compile_context>
chip_gen: v6e
topology: v6e:2x2x1
jax: 0.10.0
libtpu: 0.0.40
codegen_flags: <defaults>
</compile_context>

<pallas_src>
import jax
import jax.numpy as jnp
from jax.experimental import pallas as pl
from jax.experimental.pallas import tpu as pltpu


LANE = 128        # TPU lane width
FEAT = 4          # Linear(4, 4)
PER_ROW = LANE // FEAT   # 32 batch elements per 128-lane row


def mycell_kernel(x_ref, h_ref, m_ref, b_ref, o_ref):
    # Flat lane-dense layout:
    #   x_ref, h_ref, o_ref : (tile_rows, 128)  -- lane l = (batch%32)*4 + feature
    #   m_ref               : (128, 128) block-diagonal, 32 copies of W.T
    #   b_ref               : (1, 128)   bias tiled 32x (broadcasts over rows)
    # One MXU matmul performs the per-group 4x4 contraction for all 32 batch
    # elements in a row simultaneously; adds are VPU, tanh lands on the EUP.
    y = jnp.dot(x_ref[...], m_ref[...], preferred_element_type=jnp.float32)
    o_ref[...] = jnp.tanh(y + h_ref[...] + b_ref[...]).astype(o_ref.dtype)


def _pick_tile_rows(rows: int, max_tile_rows: int) -> int:
    # ~1 MiB per tiled buffer at the cap (2048 * 128 * 4 B), but keep >= 4 grid
    # steps when there is enough work (2 pipelined steps per TC on v7x megacore).
    t = min(max_tile_rows, max(8, rows // 4))
    t = max(8, (t // 8) * 8)          # sublane-aligned, never collapses to 0
    return t


def mycell_forward(x, h, weight, bias, *, max_tile_rows=2048):
    """Pallas equivalent of MyCell.forward.

    x:      (B, 4) float32
    h:      (B, 4) float32
    weight: (4, 4) float32, PyTorch layout (out_features, in_features)
    bias:   (4,)   float32
    returns (h_, h_) with h_ = tanh(x @ weight.T + bias + h), shape (B, 4)
    """
    B, f_in = x.shape
    f_out, _ = weight.shape
    assert f_in == FEAT and f_out == FEAT, "MyCell uses nn.Linear(4, 4)"

    total = B * FEAT
    rows = pl.cdiv(total, LANE)
    tile_rows = _pick_tile_rows(rows, max_tile_rows)
    rows_pad = pl.cdiv(rows, tile_rows) * tile_rows
    pad = rows_pad * LANE - total

    # Zero-copy flat views when B is already aligned; otherwise a single pad.
    xf = x.reshape(-1)
    hf = h.reshape(-1)
    if pad:
        xf = jnp.pad(xf, (0, pad))
        hf = jnp.pad(hf, (0, pad))
    xf = xf.reshape(rows_pad, LANE)
    hf = hf.reshape(rows_pad, LANE)

    # One-time tiny parameter prep (64 KiB + 512 B; fuses under jit):
    #   M = blockdiag(W.T x 32)  so  (flat_x @ M)[:, 32b*4+j] = sum_k x[b,k]*W[j,k]
    m = jnp.kron(jnp.eye(PER_ROW, dtype=x.dtype), weight.T.astype(x.dtype))
    b_tiled = jnp.tile(bias.astype(x.dtype), PER_ROW).reshape(1, LANE)

    grid = (rows_pad // tile_rows,)

    out_flat = pl.pallas_call(
        mycell_kernel,
        out_shape=jax.ShapeDtypeStruct((rows_pad, LANE), x.dtype),
        grid=grid,
        in_specs=[
            pl.BlockSpec((tile_rows, LANE), lambda i: (i, 0)),   # x tile
            pl.BlockSpec((tile_rows, LANE), lambda i: (i, 0)),   # h tile
            pl.BlockSpec((LANE, LANE), lambda i: (0, 0)),        # block-diag W.T (replicated)
            pl.BlockSpec((1, LANE), lambda i: (0, 0)),           # tiled bias (replicated)
        ],
        out_specs=pl.BlockSpec((tile_rows, LANE), lambda i: (i, 0)),
        compiler_params=pltpu.CompilerParams(
            dimension_semantics=("parallel",),   # batch tiles split across TCs (v7x)
        ),
    )(xf, hf, m, b_tiled)

    # Zero-copy view back to (B, 4) (slice is a no-op when pad == 0).
    h_ = out_flat.reshape(-1)[:total].reshape(B, FEAT)
    return h_, h_


if __name__ == "__main__":
    key = jax.random.PRNGKey(0)
    k_x, k_h, k_w, k_b = jax.random.split(key, 4)

    B, F = 256, 4  # Linear(4, 4): in_features = out_features = 4

    x = jax.random.normal(k_x, (B, F), dtype=jnp.float32)
    h = jax.random.normal(k_h, (B, F), dtype=jnp.float32)

    # Deterministic init mirroring nn.Linear's U(-1/sqrt(fan_in), +1/sqrt(fan_in)).
    bound = 1.0 / (F ** 0.5)
    weight = jax.random.uniform(k_w, (F, F), dtype=jnp.float32,
                                minval=-bound, maxval=bound)
    bias = jax.random.uniform(k_b, (F,), dtype=jnp.float32,
                              minval=-bound, maxval=bound)

    fwd = jax.jit(mycell_forward, static_argnames=("max_tile_rows",))
    h_out, h_out2 = fwd(x, h, weight, bias)
    jax.block_until_ready(h_out)
    jax.block_until_ready(h_out2)

    # Sanity check vs. plain-JAX reference.  Tolerance is loose enough to cover
    # possible bf16 MXU passes at default f32 matmul precision; any structural
    # bug (wrong weight layout / bias / hidden add) would be O(0.1 - 1).
    ref = jnp.tanh(x @ weight.T + bias + h)
    assert jnp.allclose(h_out, ref, atol=1e-2, rtol=1e-2), "mismatch vs reference"
    assert jnp.array_equal(h_out, h_out2)

    # Also exercise the padded path (batch not a multiple of 32).
    B2 = 100
    x2 = jax.random.normal(k_x, (B2, F), dtype=jnp.float32)
    h2 = jax.random.normal(k_h, (B2, F), dtype=jnp.float32)
    o2, _ = fwd(x2, h2, weight, bias)
    jax.block_until_ready(o2)
    ref2 = jnp.tanh(x2 @ weight.T + bias + h2)
    assert jnp.allclose(o2, ref2, atol=1e-2, rtol=1e-2), "mismatch (padded path)"

    print("KERNEL_OK")
</pallas_src>

<mosaic_0001>
module attributes {stable_mosaic.version = 11 : i64} {
  func.func @mycell_kernel(%arg0: i32, %arg1: memref<8x128xf32, #tpu.memory_space<vmem>>, %arg2: memref<8x128xf32, #tpu.memory_space<vmem>>, %arg3: memref<128x128xf32, #tpu.memory_space<vmem>>, %arg4: memref<1x128xf32, #tpu.memory_space<vmem>>, %arg5: memref<8x128xf32, #tpu.memory_space<vmem>>) attributes {dimension_semantics = [#tpu.dimension_semantics<parallel>], iteration_bounds = array<i64: 1>, scalar_prefetch = 0 : i64, scratch_operands = 0 : i64, tpu.core_type = #tpu.core_type<tc>, window_params = [{transform_indices = @transform_0, window_bounds = array<i64: 8, 128>}, {transform_indices = @transform_1, window_bounds = array<i64: 8, 128>}, {pipeline_mode = #tpu.pipeline_mode<synchronous>, transform_indices = @transform_2, window_bounds = array<i64: 128, 128>}, {pipeline_mode = #tpu.pipeline_mode<synchronous>, transform_indices = @transform_3, window_bounds = array<i64: 1, 128>}, {transform_indices = @transform_4, window_bounds = array<i64: 8, 128>}]} {
    %c0 = arith.constant 0 : index
    %c0_0 = arith.constant 0 : index
    %0 = vector.load %arg1[%c0, %c0_0] : memref<8x128xf32, #tpu.memory_space<vmem>>, vector<8x128xf32>
    %c0_1 = arith.constant 0 : index
    %c0_2 = arith.constant 0 : index
    %1 = vector.load %arg3[%c0_1, %c0_2] : memref<128x128xf32, #tpu.memory_space<vmem>>, vector<128x128xf32>
    %cst = arith.constant dense<0.000000e+00> : vector<8x128xf32>
    %2 = tpu.matmul %0, %1, %cst {dimension_numbers = #tpu.dot_dimension_numbers<[1], [0], [0], [1], [0, 0, 1, 1], [], []>} : vector<8x128xf32>, vector<128x128xf32>, vector<8x128xf32> -> vector<8x128xf32>
    %c0_3 = arith.constant 0 : index
    %c0_4 = arith.constant 0 : index
    %3 = vector.load %arg2[%c0_3, %c0_4] : memref<8x128xf32, #tpu.memory_space<vmem>>, vector<8x128xf32>
    %4 = arith.addf %2, %3 : vector<8x128xf32>
    %c0_5 = arith.constant 0 : index
    %c0_6 = arith.constant 0 : index
    %5 = vector.load %arg4[%c0_5, %c0_6] : memref<1x128xf32, #tpu.memory_space<vmem>>, vector<1x128xf32>
    %6 = vector.broadcast %5 : vector<1x128xf32> to vector<8x128xf32>
    %7 = arith.addf %4, %6 : vector<8x128xf32>
    %8 = math.tanh %7 : vector<8x128xf32>
    %c0_7 = arith.constant 0 : index
    %c0_8 = arith.constant 0 : index
    %9 = vector.load %arg5[%c0_7, %c0_8] : memref<8x128xf32, #tpu.memory_space<vmem>>, vector<8x128xf32>
    tpu.vector_store %arg5[%c0_7, %c0_8], %8 {strides = array<i32>} : memref<8x128xf32, #tpu.memory_space<vmem>>, vector<8x128xf32>,
    return
  }
  func.func @transform_0(%arg0: i32) -> (i32, i32) {
    %c0_i32 = arith.constant 0 : i32
    %c0_i32_0 = arith.constant 0 : i32
    return %arg0, %c0_i32 : i32, i32
  }
  func.func @transform_1(%arg0: i32) -> (i32, i32) {
    %c0_i32 = arith.constant 0 : i32
    %c0_i32_0 = arith.constant 0 : i32
    return %arg0, %c0_i32 : i32, i32
  }
  func.func @transform_2(%arg0: i32) -> (i32, i32) {
    %c0_i32 = arith.constant 0 : i32
    %c0_i32_0 = arith.constant 0 : i32
    %c0_i32_1 = arith.constant 0 : i32
    return %c0_i32, %c0_i32_0 : i32, i32
  }
  func.func @transform_3(%arg0: i32) -> (i32, i32) {
    %c0_i32 = arith.constant 0 : i32
    %c0_i32_0 = arith.constant 0 : i32
    %c0_i32_1 = arith.constant 0 : i32
    return %c0_i32, %c0_i32_0 : i32, i32
  }
  func.func @transform_4(%arg0: i32) -> (i32, i32) {
    %c0_i32 = arith.constant 0 : i32
    %c0_i32_0 = arith.constant 0 : i32
    return %arg0, %c0_i32 : i32, i32
  }
}

</mosaic_0001>

<llo_original>
// kernel: tile.8
$region0: #{tile.8}
  #allocation0 [shape = 's32[1]{0}', space=sflag, size = 0x4, scoped, tag = 'scoped memory for tile.8']
  %s0 = inlined_call_operand.vmem [shape: f32[4], index: 0, kind: input, shape index: {}]
  %s1 = inlined_call_operand.vmem [shape: f32[32,4], index: 1, kind: output, shape index: {}]
  // Predicated region
  $region2: #{tile.8} parent=0 // pred_check
    _
  $region3: #{tile.8} parent=0 // pred_check_branch
    %3 = sbr.rel (0) target = $region5
  $region4: #{tile.8} parent=0 // pred_region
    _
  $region5: #{tile.8} parent=0 // pred_fallthru
    _
  %v4 = vld [vmem:[%s0] ss:$0 sm:$0xff]
  %5 = vst [vmem:[%s1] sm:$0xff] %v4
  %s6 = scalar_lea.vmem %s1, 8
  %7 = vst [vmem:[%s6] sm:$0xff] %v4
  %s8 = scalar_lea.vmem %s1, 16
  %9 = vst [vmem:[%s8] sm:$0xff] %v4
  %s10 = scalar_lea.vmem %s1, 24
  %11 = vst [vmem:[%s10] sm:$0xff] %v4

// kernel: tile.9
$region0: #{tile.9}
  %s0 = inlined_call_operand.vmem [shape: f32[32,4], index: 0, kind: input, shape index: {}]
  %s1 = inlined_call_operand.vmem [shape: f32[1,128], index: 1, kind: output, shape index: {}]
  $region1: #{tile.9} parent=0
    #allocation0 [shape = 'u8[4096]{0}', space=vmem, size = 0x1000, scoped, tag = 'scoped mem for output reshape']
    %v2 = vld [vmem:[%s0] sm:$0x1]
    %vm3 = vcmask 31744
    %4 = vst.msk [vmem:[#allocation0] sm:$0x1] %vm3, %v2
    %s5 = scalar_lea.vmem %s0, 31
    %v6 = vld [vmem:[%s5] sm:$0x1]
    %7 = vrot.lane.b32.xlu0 %v6, 124
    %v8 = vpop.permute.xlu0 %7
    %vm9 = vcmask 1048544
    %10 = vst.msk [vmem:[#allocation0] sm:$0x1] %vm9, %v8
    %s11 = scalar_lea.vmem %s0, 30
    %v12 = vld [vmem:[%s11] sm:$0x1]
    %13 = vrot.lane.b32.xlu0 %v12, 120
    %v14 = vpop.permute.xlu0 %13
    %vm15 = vcmask 1015744
    %16 = vst.msk [vmem:[#allocation0] sm:$0x1] %vm15, %v14
    %s17 = scalar_lea.vmem %s0, 29
    %v18 = vld [vmem:[%s17] sm:$0x1]
    %19 = vrot.lane.b32.xlu0 %v18, 116
    %v20 = vpop.permute.xlu0 %19
    %vm21 = vcmask 982944
    %22 = vst.msk [vmem:[#allocation0] sm:$0x1] %vm21, %v20
    %s23 = scalar_lea.vmem %s0, 28
    %v24 = vld [vmem:[%s23] sm:$0x1]
    %25 = vrot.lane.b32.xlu0 %v24, 112
    %v26 = vpop.permute.xlu0 %25
    %vm27 = vcmask 950144
    %28 = vst.msk [vmem:[#allocation0] sm:$0x1] %vm27, %v26
    %s29 = scalar_lea.vmem %s0, 27
    %v30 = vld [vmem:[%s29] sm:$0x1]
    %31 = vrot.lane.b32.xlu0 %v30, 108
    %v32 = vpop.permute.xlu0 %31
    %vm33 = vcmask 917344
    %34 = vst.msk [vmem:[#allocation0] sm:$0x1] %vm33, %v32
    %s35 = scalar_lea.vmem %s0, 26
    %v36 = vld [vmem:[%s35] sm:$0x1]
    %37 = vrot.lane.b32.xlu0 %v36, 104
    %v38 = vpop.permute.xlu0 %37
    %vm39 = vcmask 884544
    %40 = vst.msk [vmem:[#allocation0] sm:$0x1] %vm39, %v38
    %s41 = scalar_lea.vmem %s0, 25
    %v42 = vld [vmem:[%s41] sm:$0x1]
    %43 = vrot.lane.b32.xlu0 %v42, 100
    %v44 = vpop.permute.xlu0 %43
    %vm45 = vcmask 851744
    %46 = vst.msk [vmem:[#allocation0] sm:$0x1] %vm45, %v44
    %s47 = scalar_lea.vmem %s0, 24
    %v48 = vld [vmem:[%s47] sm:$0x1]
    %49 = vrot.lane.b32.xlu0 %v48, 96
    %v50 = vpop.permute.xlu0 %49
    %vm51 = vcmask 818944
    %52 = vst.msk [vmem:[#allocation0] sm:$0x1] %vm51, %v50
    %s53 = scalar_lea.vmem %s0, 23
    %v54 = vld [vmem:[%s53] sm:$0x1]
    %55 = vrot.lane.b32.xlu0 %v54, 92
    %v56 = vpop.permute.xlu0 %55
    %vm57 = vcmask 786144
    %58 = vst.msk [vmem:[#allocation0] sm:$0x1] %vm57, %v56
    %s59 = scalar_lea.vmem %s0, 22
    %v60 = vld [vmem:[%s59] sm:$0x1]
    %61 = vrot.lane.b32.xlu0 %v60, 88
    %v62 = vpop.permute.xlu0 %61
    %vm63 = vcmask 753344
    %64 = vst.msk [vmem:[#allocation0] sm:$0x1] %vm63, %v62
    %s65 = scalar_lea.vmem %s0, 21
    %v66 = vld [vmem:[%s65] sm:$0x1]
    %67 = vrot.lane.b32.xlu0 %v66, 84
    %v68 = vpop.permute.xlu0 %67
    %vm69 = vcmask 720544
    %70 = vst.msk [vmem:[#allocation0] sm:$0x1] %vm69, %v68
    %s71 = scalar_lea.vmem %s0, 20
    %v72 = vld [vmem:[%s71] sm:$0x1]
    %73 = vrot.lane.b32.xlu0 %v72, 80
    %v74 = vpop.permute.xlu0 %73
    %vm75 = vcmask 687744
    %76 = vst.msk [vmem:[#allocation0] sm:$0x1] %vm75, %v74
    %s77 = scalar_lea.vmem %s0, 19
    %v78 = vld [vmem:[%s77] sm:$0x1]
    %79 = vrot.lane.b32.xlu0 %v78, 76
    %v80 = vpop.permute.xlu0 %79
    %vm81 = vcmask 654944
    %82 = vst.msk [vmem:[#allocation0] sm:$0x1] %vm81, %v80
    %s83 = scalar_lea.vmem %s0, 18
    %v84 = vld [vmem:[%s83] sm:$0x1]
    %85 = vrot.lane.b32.xlu0 %v84, 72
    %v86 = vpop.permute.xlu0 %85
    %vm87 = vcmask 622144
    %88 = vst.msk [vmem:[#allocation0] sm:$0x1] %vm87, %v86
    %s89 = scalar_lea.vmem %s0, 17
    %v90 = vld [vmem:[%s89] sm:$0x1]
    %91 = vrot.lane.b32.xlu0 %v90, 68
    %v92 = vpop.permute.xlu0 %91
    %vm93 = vcmask 589344
    %94 = vst.msk [vmem:[#allocation0] sm:$0x1] %vm93, %v92
    %s95 = scalar_lea.vmem %s0, 16
    %v96 = vld [vmem:[%s95] sm:$0x1]
    %97 = vrot.lane.b32.xlu0 %v96, 64
    %v98 = vpop.permute.xlu0 %97
    %vm99 = vcmask 556544
    %100 = vst.msk [vmem:[#allocation0] sm:$0x1] %vm99, %v98
    %s101 = scalar_lea.vmem %s0, 15
    %v102 = vld [vmem:[%s101] sm:$0x1]
    %103 = vrot.lane.b32.xlu0 %v102, 60
    %v104 = vpop.permute.xlu0 %103
    %vm105 = vcmask 523744
    %106 = vst.msk [vmem:[#allocation0] sm:$0x1] %vm105, %v104
    %s107 = scalar_lea.vmem %s0, 14
    %v108 = vld [vmem:[%s107] sm:$0x1]
    %109 = vrot.lane.b32.xlu0 %v108, 56
    %v110 = vpop.permute.xlu0 %109
    %vm111 = vcmask 490944
    %112 = vst.msk [vmem:[#allocation0] sm:$0x1] %vm111, %v110
    %s113 = scalar_lea.vmem %s0, 13
    %v114 = vld [vmem:[%s113] sm:$0x1]
    %115 = vrot.lane.b32.xlu0 %v114, 52
    %v116 = vpop.permute.xlu0 %115
    %vm117 = vcmask 458144
    %118 = vst.msk [vmem:[#allocation0] sm:$0x1] %vm117, %v116
    %s119 = scalar_lea.vmem %s0, 12
    %v120 = vld [vmem:[%s119] sm:$0x1]
    %121 = vrot.lane.b32.xlu0 %v120, 48
    %v122 = vpop.permute.xlu0 %121
    %vm123 = vcmask 425344
    %124 = vst.msk [vmem:[#allocation0] sm:$0x1] %vm123, %v122
    %s125 = scalar_lea.vmem %s0, 11
    %v126 = vld [vmem:[%s125] sm:$0x1]
    %127 = vrot.lane.b32.xlu0 %v126, 44
    %v128 = vpop.permute.xlu0 %127
    %vm129 = vcmask 392544
    %130 = vst.msk [vmem:[#allocation0] sm:$0x1] %vm129, %v128
    %s131 = scalar_lea.vmem %s0, 10
    %v132 = vld [vmem:[%s131] sm:$0x1]
    %133 = vrot.lane.b32.xlu0 %v132, 40
    %v134 = vpop.permute.xlu0 %133
    %vm135 = vcmask 359744
    %136 = vst.msk [vmem:[#allocation0] sm:$0x1] %vm135, %v134
    %s137 = scalar_lea.vmem %s0, 9
    %v138 = vld [vmem:[%s137] sm:$0x1]
    %139 = vrot.lane.b32.xlu0 %v138, 36
    %v140 = vpop.permute.xlu0 %139
    %vm141 = vcmask 326944
    %142 = vst.msk [vmem:[#allocation0] sm:$0x1] %vm141, %v140
    %s143 = scalar_lea.vmem %s0, 8
    %v144 = vld [vmem:[%s143] sm:$0x1]
    %145 = vrot.lane.b32.xlu0 %v144, 32
    %v146 = vpop.permute.xlu0 %145
    %vm147 = vcmask 294144
    %148 = vst.msk [vmem:[#allocation0] sm:$0x1] %vm147, %v146
    %s149 = scalar_lea.vmem %s0, 7
    %v150 = vld [vmem:[%s149] sm:$0x1]
    %151 = vrot.lane.b32.xlu0 %v150, 28
    %v152 = vpop.permute.xlu0 %151
    %vm153 = vcmask 261344
    %154 = vst.msk [vmem:[#allocation0] sm:$0x1] %vm153, %v152
    %s155 = scalar_lea.vmem %s0, 6
    %v156 = vld [vmem:[%s155] sm:$0x1]
    %157 = vrot.lane.b32.xlu0 %v156, 24
    %v158 = vpop.permute.xlu0 %157
    %vm159 = vcmask 228544
    %160 = vst.msk [vmem:[#allocation0] sm:$0x1] %vm159, %v158
    %s161 = scalar_lea.vmem %s0, 5
    %v162 = vld [vmem:[%s161] sm:$0x1]
    %163 = vrot.lane.b32.xlu0 %v162, 20
    %v164 = vpop.permute.xlu0 %163
    %vm165 = vcmask 195744
    %166 = vst.msk [vmem:[#allocation0] sm:$0x1] %vm165, %v164
    %s167 = scalar_lea.vmem %s0, 4
    %v168 = vld [vmem:[%s167] sm:$0x1]
    %169 = vrot.lane.b32.xlu0 %v168, 16
    %v170 = vpop.permute.xlu0 %169
    %vm171 = vcmask 162944
    %172 = vst.msk [vmem:[#allocation0] sm:$0x1] %vm171, %v170
    %s173 = scalar_lea.vmem %s0, 3
    %v174 = vld [vmem:[%s173] sm:$0x1]
    %175 = vrot.lane.b32.xlu0 %v174, 12
    %v176 = vpop.permute.xlu0 %175
    %vm177 = vcmask 130144
    %178 = vst.msk [vmem:[#allocation0] sm:$0x1] %vm177, %v176
    %s179 = scalar_lea.vmem %s0, 2
    %v180 = vld [vmem:[%s179] sm:$0x1]
    %181 = vrot.lane.b32.xlu0 %v180, 8
    %v182 = vpop.permute.xlu0 %181
    %vm183 = vcmask 97344
    %184 = vst.msk [vmem:[#allocation0] sm:$0x1] %vm183, %v182
    %s185 = scalar_lea.vmem %s0, 1
    %v186 = vld [vmem:[%s185] sm:$0x1]
    %187 = vrot.lane.b32.xlu0 %v186, 4
    %v188 = vpop.permute.xlu0 %187
    %vm189 = vcmask 64544
    %190 = vst.msk [vmem:[#allocation0] sm:$0x1] %vm189, %v188
    %s192 = sshll.u32 1, 1
    %s193 = ssub.s32 %s192, 1
    %v195 = vld [vmem:[#allocation0] sm:%s193]
    %s196 = sshll.u32 1, 1
    %s197 = ssub.s32 %s196, 1
    %198 = vst [vmem:[%s1] sm:%s197] %v195

// kernel: mycell_forward.1
$region0: #{mycell_forward.1}
  #allocation0 [shape = 'u32[]', space=smem, size = 0x4, offset = 0x4, fixed_abs, tag = 'smem constant byte address 0x4 - core index']
  #allocation1 [shape = 'u32[144,128]{1,0:T(1,128)}', space=vmem, size = 0x12000, scoped, tag = 'internal scratch']
  %s0 = inlined_call_operand.vmem [shape: f32[8,128], index: 0, kind: input, shape index: {}]
  %s1 = inlined_call_operand.vmem [shape: f32[8,128], index: 1, kind: input, shape index: {}]
  %s2 = inlined_call_operand.vmem [shape: f32[128,128], index: 2, kind: input, shape index: {}]
  %s3 = inlined_call_operand.vmem [shape: f32[1,128], index: 3, kind: input, shape index: {}]
  %s4 = inlined_call_operand.vmem [shape: f32[8,128], index: 4, kind: output, shape index: {}]
  %s5 = sld [smem:[#allocation0]]
  $region26: #{mycell_forward.1} parent=0
    _
  %s7 = ssub.s32 1, %s5
  %s8 = scalar_select 0, %s7, %s5
  // Predicated region
  $region2: #{mycell_forward.1} parent=0 // pred_check
    _
  $region3: #{mycell_forward.1} parent=0 // pred_check_branch
    %10 = sbr.rel (0) target = $region5
  $region4: #{mycell_forward.1} parent=0 // pred_region
    _
  $region5: #{mycell_forward.1} parent=0 // pred_fallthru
    _
  // Predicated region
  $region6: #{mycell_forward.1} parent=0 // pred_check
    _
  $region7: #{mycell_forward.1} parent=0 // pred_check_branch
    %12 = sbr.rel (0) target = $region9
  $region8: #{mycell_forward.1} parent=0 // pred_region
    _
  $region9: #{mycell_forward.1} parent=0 // pred_fallthru
    _
  // Predicated region
  $region10: #{mycell_forward.1} parent=0 // pred_check
    _
  $region11: #{mycell_forward.1} parent=0 // pred_check_branch
    %14 = sbr.rel (0) target = $region13
  $region12: #{mycell_forward.1} parent=0 // pred_region
    _
  $region13: #{mycell_forward.1} parent=0 // pred_fallthru
    _
  // Predicated region
  $region14: #{mycell_forward.1} parent=0 // pred_check
    _
  $region15: #{mycell_forward.1} parent=0 // pred_check_branch
    %16 = sbr.rel (0) target = $region17
  $region16: #{mycell_forward.1} parent=0 // pred_region
    _
  $region17: #{mycell_forward.1} parent=0 // pred_fallthru
    _
  %v17 = vld [vmem:[%s0] sm:$0xff]
  %v18 = vld [vmem:[%s2] sm:$0xff]
  %v19 = vld [vmem:[%s2 + $0x8] sm:$0xff]
  %v20 = vld [vmem:[%s2 + $0x10] sm:$0xff]
  %v21 = vld [vmem:[%s2 + $0x18] sm:$0xff]
  %v22 = vld [vmem:[%s2 + $0x20] sm:$0xff]
  %v23 = vld [vmem:[%s2 + $0x28] sm:$0xff]
  %v24 = vld [vmem:[%s2 + $0x30] sm:$0xff]
  %v25 = vld [vmem:[%s2 + $0x38] sm:$0xff]
  %v26 = vld [vmem:[%s2 + $0x40] sm:$0xff]
  %v27 = vld [vmem:[%s2 + $0x48] sm:$0xff]
  %v28 = vld [vmem:[%s2 + $0x50] sm:$0xff]
  %v29 = vld [vmem:[%s2 + $0x58] sm:$0xff]
  %v30 = vld [vmem:[%s2 + $0x60] sm:$0xff]
  %v31 = vld [vmem:[%s2 + $0x68] sm:$0xff]
  %v32 = vld [vmem:[%s2 + $0x70] sm:$0xff]
  %v33 = vld [vmem:[%s2 + $0x78] sm:$0xff]
  %v34 = vld [vmem:[%s1] sm:$0xff]
  %35 = vmatprep.subr.mxu0 0.0
  %36 = vmatpush1.msra.mxu0 %v33
  %37 = vmatprep.subr.mxu0 0.0
  %38 = vmatpush1.msra.mxu0 %v32
  %39 = vmatprep.subr.mxu0 0.0
  %40 = vmatpush1.msra.mxu0 %v31
  %41 = vmatprep.subr.mxu0 0.0
  %42 = vmatpush1.msra.mxu0 %v30
  %43 = vmatprep.subr.mxu0 0.0
  %44 = vmatpush1.msra.mxu0 %v29
  %45 = vmatprep.subr.mxu0 0.0
  %46 = vmatpush1.msra.mxu0 %v28
  %47 = vmatprep.subr.mxu0 0.0
  %48 = vmatpush1.msra.mxu0 %v27
  %49 = vmatprep.subr.mxu0 0.0
  %50 = vmatpush1.msra.mxu0 %v26
  %51 = vmatprep.subr.mxu0 0.0
  %52 = vmatpush1.msra.mxu0 %v25
  %53 = vmatprep.subr.mxu0 0.0
  %54 = vmatpush1.msra.mxu0 %v24
  %55 = vmatprep.subr.mxu0 0.0
  %56 = vmatpush1.msra.mxu0 %v23
  %57 = vmatprep.subr.mxu0 0.0
  %58 = vmatpush1.msra.mxu0 %v22
  %59 = vmatprep.subr.mxu0 0.0
  %60 = vmatpush1.msra.mxu0 %v21
  %61 = vmatprep.subr.mxu0 0.0
  %62 = vmatpush1.msra.mxu0 %v20
  %63 = vmatprep.subr.mxu0 0.0
  %64 = vmatpush1.msra.mxu0 %v19
  %65 = vmatprep.subr.mxu0 0.0
  %66 = vmatpush1.msra.mxu0 %v18
  %67 = vmatprep.subr.mxu0 0.0
  %68 = vmatpush2.msra.mxu0 0.0
  %69 = vmatprep.subr.mxu0 0.0
  %70 = vmatpush2.msra.mxu0 0.0
  %71 = vmatprep.subr.mxu0 0.0
  %72 = vmatpush2.msra.mxu0 0.0
  %73 = vmatprep.subr.mxu0 0.0
  %74 = vmatpush2.msra.mxu0 0.0
  %75 = vmatprep.subr.mxu0 0.0
  %76 = vmatpush2.msra.mxu0 0.0
  %77 = vmatprep.subr.mxu0 0.0
  %78 = vmatpush2.msra.mxu0 0.0
  %79 = vmatprep.subr.mxu0 0.0
  %80 = vmatpush2.msra.mxu0 0.0
  %81 = vmatprep.subr.mxu0 0.0
  %82 = vmatpush2.msra.mxu0 0.0
  %83 = vmatprep.subr.mxu0 0.0
  %84 = vmatpush2.msra.mxu0 0.0
  %85 = vmatprep.subr.mxu0 0.0
  %86 = vmatpush2.msra.mxu0 0.0
  %87 = vmatprep.subr.mxu0 0.0
  %88 = vmatpush2.msra.mxu0 0.0
  %89 = vmatprep.subr.mxu0 0.0
  %90 = vmatpush2.msra.mxu0 0.0
  %91 = vmatprep.subr.mxu0 0.0
  %92 = vmatpush2.msra.mxu0 0.0
  %93 = vmatprep.subr.mxu0 0.0
  %94 = vmatpush2.msra.mxu0 0.0
  %95 = vmatprep.subr.mxu0 0.0
  %96 = vmatpush2.msra.mxu0 0.0
  %97 = vmatprep.subr.mxu0 0.0
  %98 = vmatpush2.msra.mxu0 0.0
  %99 = vmatprep.mubr.f32.mxu0 0.0
  %100 = vmatmul.mubr.f32.gmra.mxu0 %v17
  %v101 = vpop.f32.mrf.mxu0
  %v102 = vadd.f32 %v34, %v101
  %v103 = vpop.f32.mrf.mxu0
  %104 = vdwg.mxu0
  %v105 = vld [vmem:[%s3] sm:$0x1]
  %v107 = vlaneseq
  %v108 = vshrl.u32 %v107, 7
  %v109 = vsub.s32 0, %v108
  %v110 = vrot.slane %v105, %v109
  %v112 = vadd.f32 %v102, %v110
  %v113 = vtanh.pop %v112
  %114 = vst [vmem:[%s4] sm:$0xff] %v113
  // Predicated region
  $region18: #{mycell_forward.1} parent=0 // pred_check
    _
  $region19: #{mycell_forward.1} parent=0 // pred_check_branch
    %116 = sbr.rel (0) target = $region21
  $region20: #{mycell_forward.1} parent=0 // pred_region
    _
  $region21: #{mycell_forward.1} parent=0 // pred_fallthru
    _
  // Predicated region
  $region22: #{mycell_forward.1} parent=0 // pred_check
    _
  $region23: #{mycell_forward.1} parent=0 // pred_check_branch
    %118 = sbr.rel (0) target = $region25
  $region24: #{mycell_forward.1} parent=0 // pred_region
    _
  $region25: #{mycell_forward.1} parent=0 // pred_fallthru
    _

</llo_original>
